<compile_context>
chip_gen: v7x
topology: tpu7x:2x2x1
jax: 0.10.0
libtpu: 0.0.40
codegen_flags: <defaults>
</compile_context>

<pallas_src>
import functools

import jax
import jax.numpy as jnp
from jax.experimental import pallas as pl
from jax.experimental.pallas import tpu as pltpu


def _round_up(x, m):
    return (x + m - 1) // m * m


def _convnorm_kernel(x_ref, w_ref, g_ref, b_ref, o_ref, *, inv_count, eps):
    """One grid step == one batch element.

    x_ref: (1, C_aug, T_out_p)   im2col-stacked input (bf16); bias ones-row included;
                                 exactly zero in padded rows / padded time columns.
    w_ref: (nOut_p, C_aug)       augmented conv weight (bf16); bias in its own column.
    g_ref: (nOut_p, 1)           GlobLN gamma (f32), zero in padded channels.
    b_ref: (nOut_p, 1)           GlobLN beta  (f32), zero in padded channels.
    o_ref: (1, nOut_p, T_out_p)  output.
    """
    # Conv1d (+ bias) as a single MXU matmul with K*nIn contraction depth,
    # f32 accumulation.
    acc = jnp.dot(w_ref[...], x_ref[0], preferred_element_type=jnp.float32)

    # GlobLN statistics over the true (nOut, T_out) region. Padded rows/columns of
    # `acc` are exactly zero (zero weight rows / masked im2col columns), so plain
    # full-tile sums divided by the true count give the exact mean / E[x^2].
    s = jnp.sum(acc)
    sq = jnp.sum(acc * acc)
    mean = s * inv_count
    var = sq * inv_count - mean * mean          # E[x^2] - mean^2, f32 + eps
    inv_std = jax.lax.rsqrt(var + eps)          # EUP rsqrt

    # Single FMA epilogue: y = acc * scale + shift (bias already inside acc).
    scale = g_ref[...] * inv_std                # (nOut_p, 1)
    shift = b_ref[...] - mean * scale           # (nOut_p, 1)
    o_ref[0] = (acc * scale + shift).astype(o_ref.dtype)


def conv_norm(x, weight, bias, gamma, beta, *, stride=1, eps=1e-8,
              compute_dtype=jnp.bfloat16):
    """ConvNorm forward. x: (B, nIn, T); weight: (nOut, nIn, K)."""
    B, nIn, T = x.shape
    nOut, nIn_w, K = weight.shape
    assert nIn_w == nIn, "groups=1 only"  # TODO(synk): grouped conv not implemented
    # Matches PyTorch int((kSize-1)/2); exact "same" behavior only for odd K.
    pad = (K - 1) // 2
    T_out = (T + 2 * pad - K) // stride + 1

    SUB, LANE = 8, 128
    nIn_p = _round_up(nIn, SUB)
    nOut_p = _round_up(nOut, SUB)
    T_out_p = _round_up(max(T_out, LANE), LANE)
    C_aug = _round_up(K * nIn_p + 1, SUB)       # K taps * nIn_p channels + bias row

    # ---- wrapper-side glue (layout only; all heavy compute stays in the kernel) ----
    # Zero-pad channels and time so every tap/stride slice of length T_out_p is
    # in-bounds.
    T_need = (K - 1) + stride * (T_out_p - 1) + 1
    x_p = jnp.pad(x, ((0, 0), (0, nIn_p - nIn),
                      (pad, max(0, T_need - T - pad))))

    # im2col: stack K tap-shifted / stride-decimated views along the channel axis,
    # then zero all time columns >= T_out so the conv result is exactly zero there.
    cols = [x_p[:, :, k: k + stride * (T_out_p - 1) + 1: stride] for k in range(K)]
    x_col = jnp.concatenate(cols, axis=1)                       # (B, K*nIn_p, T_out_p)
    tmask = jnp.arange(T_out_p) < T_out
    x_col = jnp.where(tmask[None, None, :], x_col, 0).astype(x.dtype)
    ones_row = jnp.broadcast_to(tmask.astype(x.dtype), (B, 1, T_out_p))
    zrows = jnp.zeros((B, C_aug - K * nIn_p - 1, T_out_p), x.dtype)
    x_aug = jnp.concatenate([x_col, ones_row, zrows], axis=1).astype(compute_dtype)

    # Augmented weight (nOut_p, C_aug): W_aug[o, k*nIn_p + i] = weight[o, i, k],
    # conv bias in column K*nIn_p, zeros elsewhere (padded channels).
    w_p = jnp.pad(weight, ((0, nOut_p - nOut), (0, nIn_p - nIn), (0, 0)))
    w2 = jnp.transpose(w_p, (0, 2, 1)).reshape(nOut_p, K * nIn_p)
    b_col = jnp.pad(bias, (0, nOut_p - nOut)).reshape(nOut_p, 1)
    w_aug = jnp.concatenate(
        [w2, b_col, jnp.zeros((nOut_p, C_aug - K * nIn_p - 1), w2.dtype)],
        axis=1).astype(compute_dtype)

    g2 = jnp.pad(gamma, (0, nOut_p - nOut)).reshape(nOut_p, 1).astype(jnp.float32)
    be2 = jnp.pad(beta, (0, nOut_p - nOut)).reshape(nOut_p, 1).astype(jnp.float32)

    kernel = functools.partial(
        _convnorm_kernel, inv_count=1.0 / float(nOut * T_out), eps=float(eps))

    # TODO(synk): for very long T (audio-scale) add a time-tiled grid with a
    # two-pass GlobLN (partial sums + finalize) so per-batch blocks also fit
    # v7x's 64 MiB VMEM and both v7x TensorCores get work when B is small.
    out_p = pl.pallas_call(
        kernel,
        out_shape=jax.ShapeDtypeStruct((B, nOut_p, T_out_p), x.dtype),
        grid=(B,),
        in_specs=[
            pl.BlockSpec((1, C_aug, T_out_p), lambda b: (b, 0, 0)),
            pl.BlockSpec((nOut_p, C_aug), lambda b: (0, 0)),
            pl.BlockSpec((nOut_p, 1), lambda b: (0, 0)),
            pl.BlockSpec((nOut_p, 1), lambda b: (0, 0)),
        ],
        out_specs=pl.BlockSpec((1, nOut_p, T_out_p), lambda b: (b, 0, 0)),
        compiler_params=pltpu.CompilerParams(
            dimension_semantics=("parallel",),
            vmem_limit_bytes=64 * 1024 * 1024,
        ),
    )(x_aug, w_aug, g2, be2)

    return out_p[:, :nOut, :T_out]


def _reference(x, weight, bias, gamma, beta, *, stride=1, eps=1e-8):
    """Plain-JAX reference matching PyTorch ConvNorm semantics."""
    K = weight.shape[-1]
    pad = (K - 1) // 2
    out = jax.lax.conv_general_dilated(
        x, weight, window_strides=(stride,), padding=((pad, pad),),
        dimension_numbers=("NCH", "OIH", "NCH"),
    ) + bias[None, :, None]
    mean = jnp.mean(out, axis=(1, 2), keepdims=True)
    var = jnp.mean((out - mean) ** 2, axis=(1, 2), keepdims=True)
    normed = (out - mean) / jnp.sqrt(var + eps)
    return gamma[None, :, None] * normed + beta[None, :, None]


if __name__ == "__main__":
    # ConvNorm(nIn=4, nOut=8, kSize=3, stride=1) on a small deterministic input.
    B, nIn, T = 2, 4, 16
    nOut, K, stride = 8, 3, 1

    key = jax.random.PRNGKey(0)
    kx, kw, kb = jax.random.split(key, 3)
    x = jax.random.normal(kx, (B, nIn, T), dtype=jnp.float32)
    # Deterministic "PyTorch-like" init (uniform in +/- 1/sqrt(fan_in)).
    bound = 1.0 / (nIn * K) ** 0.5
    weight = jax.random.uniform(kw, (nOut, nIn, K), jnp.float32, -bound, bound)
    bias = jax.random.uniform(kb, (nOut,), jnp.float32, -bound, bound)
    gamma = jnp.ones((nOut,), jnp.float32)   # GlobLN gamma init = 1
    beta = jnp.zeros((nOut,), jnp.float32)   # GlobLN beta init = 0

    out = conv_norm(x, weight, bias, gamma, beta, stride=stride)
    out = jax.block_until_ready(out)

    # Compare against the reference evaluated on the same bf16-rounded
    # x / weight / bias that the kernel's MXU path sees.
    xq = x.astype(jnp.bfloat16).astype(jnp.float32)
    wq = weight.astype(jnp.bfloat16).astype(jnp.float32)
    bq = bias.astype(jnp.bfloat16).astype(jnp.float32)
    ref = _reference(xq, wq, bq, gamma, beta, stride=stride)

    assert out.shape == ref.shape
    assert jnp.max(jnp.abs(out - ref)) < 2e-3

    print("KERNEL_OK")
</pallas_src>

<mosaic_0001>
module attributes {stable_mosaic.version = 11 : i64} {
  func.func @_convnorm_kernel(%arg0: i32, %arg1: memref<1x32x128xbf16, #tpu.memory_space<vmem>>, %arg2: memref<8x32xbf16, #tpu.memory_space<vmem>>, %arg3: memref<8x1xf32, #tpu.memory_space<vmem>>, %arg4: memref<8x1xf32, #tpu.memory_space<vmem>>, %arg5: memref<1x8x128xf32, #tpu.memory_space<vmem>>) attributes {dimension_semantics = [#tpu.dimension_semantics<parallel>], iteration_bounds = array<i64: 2>, scalar_prefetch = 0 : i64, scratch_operands = 0 : i64, tpu.core_type = #tpu.core_type<tc>, window_params = [{transform_indices = @transform_0, window_bounds = array<i64: 1, 32, 128>}, {pipeline_mode = #tpu.pipeline_mode<synchronous>, transform_indices = @transform_1, window_bounds = array<i64: 8, 32>}, {pipeline_mode = #tpu.pipeline_mode<synchronous>, transform_indices = @transform_2, window_bounds = array<i64: 8, 1>}, {pipeline_mode = #tpu.pipeline_mode<synchronous>, transform_indices = @transform_3, window_bounds = array<i64: 8, 1>}, {transform_indices = @transform_4, window_bounds = array<i64: 1, 8, 128>}]} {
    %c0 = arith.constant 0 : index
    %c0_0 = arith.constant 0 : index
    %0 = vector.load %arg2[%c0, %c0_0] : memref<8x32xbf16, #tpu.memory_space<vmem>>, vector<8x32xbf16>
    %c0_1 = arith.constant 0 : index
    %c0_2 = arith.constant 0 : index
    %c0_3 = arith.constant 0 : index
    %1 = vector.load %arg1[%c0_1, %c0_2, %c0_3] : memref<1x32x128xbf16, #tpu.memory_space<vmem>>, vector<1x32x128xbf16>
    %2 = vector.shape_cast %1 : vector<1x32x128xbf16> to vector<32x128xbf16>
    %cst = arith.constant dense<0.000000e+00> : vector<8x128xf32>
    %3 = tpu.matmul %0, %2, %cst {dimension_numbers = #tpu.dot_dimension_numbers<[1], [0], [0], [1], [0, 0, 1, 1], [], []>} : vector<8x32xbf16>, vector<32x128xbf16>, vector<8x128xf32> -> vector<8x128xf32>
    %4 = vector.shape_cast %3 : vector<8x128xf32> to vector<1x8x128xf32>
    %cst_4 = arith.constant dense<0.000000e+00> : vector<1xf32>
    %5 = vector.multi_reduction <add>, %4, %cst_4 [1, 2] : vector<1x8x128xf32> to vector<1xf32>
    %6 = vector.shape_cast %5 : vector<1xf32> to vector<1x1x1xf32>
    %7 = vector.extract %6[0, 0, 0] : f32 from vector<1x1x1xf32>
    %8 = arith.mulf %3, %3 : vector<8x128xf32>
    %9 = vector.shape_cast %8 : vector<8x128xf32> to vector<1x8x128xf32>
    %cst_5 = arith.constant dense<0.000000e+00> : vector<1xf32>
    %10 = vector.multi_reduction <add>, %9, %cst_5 [1, 2] : vector<1x8x128xf32> to vector<1xf32>
    %11 = vector.shape_cast %10 : vector<1xf32> to vector<1x1x1xf32>
    %12 = vector.extract %11[0, 0, 0] : f32 from vector<1x1x1xf32>
    %cst_6 = arith.constant 7.812500e-03 : f32
    %13 = arith.mulf %7, %cst_6 : f32
    %cst_7 = arith.constant 7.812500e-03 : f32
    %14 = arith.mulf %12, %cst_7 : f32
    %15 = arith.mulf %13, %13 : f32
    %16 = arith.subf %14, %15 : f32
    %cst_8 = arith.constant 9.99999993E-9 : f32
    %17 = arith.addf %16, %cst_8 : f32
    %18 = math.rsqrt %17 : f32
    %c0_9 = arith.constant 0 : index
    %c0_10 = arith.constant 0 : index
    %19 = vector.load %arg3[%c0_9, %c0_10] : memref<8x1xf32, #tpu.memory_space<vmem>>, vector<8x1xf32>
    %20 = vector.broadcast %18 : f32 to vector<8x1xf32>
    %21 = arith.mulf %19, %20 : vector<8x1xf32>
    %c0_11 = arith.constant 0 : index
    %c0_12 = arith.constant 0 : index
    %22 = vector.load %arg4[%c0_11, %c0_12] : memref<8x1xf32, #tpu.memory_space<vmem>>, vector<8x1xf32>
    %23 = vector.broadcast %13 : f32 to vector<8x1xf32>
    %24 = arith.mulf %23, %21 : vector<8x1xf32>
    %25 = arith.subf %22, %24 : vector<8x1xf32>
    %26 = vector.broadcast %21 : vector<8x1xf32> to vector<8x128xf32>
    %27 = arith.mulf %3, %26 : vector<8x128xf32>
    %28 = vector.broadcast %25 : vector<8x1xf32> to vector<8x128xf32>
    %29 = arith.addf %27, %28 : vector<8x128xf32>
    %c0_13 = arith.constant 0 : index
    %c0_14 = arith.constant 0 : index
    %c0_15 = arith.constant 0 : index
    %30 = vector.load %arg5[%c0_13, %c0_14, %c0_15] : memref<1x8x128xf32, #tpu.memory_space<vmem>>, vector<1x8x128xf32>
    %31 = vector.shape_cast %30 : vector<1x8x128xf32> to vector<8x128xf32>
    %32 = vector.shape_cast %29 : vector<8x128xf32> to vector<1x8x128xf32>
    tpu.vector_store %arg5[%c0_13, %c0_14, %c0_15], %32 {strides = array<i32>} : memref<1x8x128xf32, #tpu.memory_space<vmem>>, vector<1x8x128xf32>,
    return
  }
  func.func @transform_0(%arg0: i32) -> (i32, i32, i32) {
    %c0_i32 = arith.constant 0 : i32
    %c0_i32_0 = arith.constant 0 : i32
    %c0_i32_1 = arith.constant 0 : i32
    return %arg0, %c0_i32, %c0_i32_0 : i32, i32, i32
  }
  func.func @transform_1(%arg0: i32) -> (i32, i32) {
    %c0_i32 = arith.constant 0 : i32
    %c0_i32_0 = arith.constant 0 : i32
    %c0_i32_1 = arith.constant 0 : i32
    return %c0_i32, %c0_i32_0 : i32, i32
  }
  func.func @transform_2(%arg0: i32) -> (i32, i32) {
    %c0_i32 = arith.constant 0 : i32
    %c0_i32_0 = arith.constant 0 : i32
    %c0_i32_1 = arith.constant 0 : i32
    return %c0_i32, %c0_i32_0 : i32, i32
  }
  func.func @transform_3(%arg0: i32) -> (i32, i32) {
    %c0_i32 = arith.constant 0 : i32
    %c0_i32_0 = arith.constant 0 : i32
    %c0_i32_1 = arith.constant 0 : i32
    return %c0_i32, %c0_i32_0 : i32, i32
  }
  func.func @transform_4(%arg0: i32) -> (i32, i32, i32) {
    %c0_i32 = arith.constant 0 : i32
    %c0_i32_0 = arith.constant 0 : i32
    %c0_i32_1 = arith.constant 0 : i32
    return %arg0, %c0_i32, %c0_i32_0 : i32, i32, i32
  }
}

</mosaic_0001>

<llo_original>
// kernel: tpu_custom_call.1
$region0: #{tpu_custom_call.1}
  #allocation0 [shape = 'u32[]', space=smem, size = 0x4, offset = 0x4, fixed_abs, tag = 'smem constant byte address 0x4 - core index']
  #allocation1 [shape = 'u32[144,128]{1,0:T(1,128)}', space=vmem, size = 0x12000, scoped, tag = 'internal scratch']
  %s0 = inlined_call_operand.hbm [shape: bf16[2,32,128], index: 0, kind: input, shape index: {}]
  %s1 = inlined_call_operand.hbm [shape: bf16[8,32], index: 1, kind: input, shape index: {}]
  %s2 = inlined_call_operand.hbm [shape: f32[8,1], index: 2, kind: input, shape index: {}]
  %s3 = inlined_call_operand.hbm [shape: f32[8,1], index: 3, kind: input, shape index: {}]
  %s4 = inlined_call_operand.hbm [shape: f32[2,8,128], index: 4, kind: output, shape index: {}]
  %s5 = sld [smem:[#allocation0]]
  $region65: #{tpu_custom_call.1} parent=0
    _
  %s7 = ssub.s32 1, %s5
  %s8 = scalar_select 0, %s7, %s5
  $region1: #{tpu_custom_call.1} parent=0
    #allocation2 [shape = 'u8[16384]{0}', space=vmem, size = 0x4000, scoped, tag = 'input window, operand 0']
    #allocation3 [shape = 's32[2]{0}', space=sflag, size = 0x8, scoped, tag = 'scoped memory for tpu_custom_call.1']
    #allocation4 [shape = 's32[2]{0}', space=sflag, size = 0x8, scoped, tag = 'scoped memory for tpu_custom_call.1']
    #allocation5 [shape = 'u8[2048]{0}', space=vmem, size = 0x800, scoped, tag = 'input window, operand 1, single buffered']
    #allocation6 [shape = 's32[1]{0}', space=sflag, size = 0x4, scoped, tag = 'scoped memory for tpu_custom_call.1']
    #allocation7 [shape = 'u8[4096]{0}', space=vmem, size = 0x1000, scoped, tag = 'input window, operand 2, single buffered']
    #allocation8 [shape = 'u8[4096]{0}', space=vmem, size = 0x1000, scoped, tag = 'input window, operand 3, single buffered']
    #allocation9 [shape = 's32[1]{0}', space=sflag, size = 0x4, scoped, tag = 'scoped memory for tpu_custom_call.1']
    #allocation10 [shape = 'u8[8192]{0}', space=vmem, size = 0x2000, scoped, tag = 'output window, operand 0']
    %9 = vsyncpa [#allocation3], 0
    %s10 = scalar_lea.sflag [#allocation3], 1
    %11 = vsyncpa %s10, 0
    %12 = vsyncpa [#allocation6], 0
    %13 = vsyncpa [#allocation9], 0
    %14 = vsyncpa [#allocation4], 0
    %s15 = scalar_lea.sflag [#allocation4], 1
    %16 = vsyncpa %s15, 0
    loop: start=0, step=1, limit=4
    $region2: #{tpu_custom_call.1} parent=1 // loop_pre_header
      _
    $region3: #{tpu_custom_call.1} parent=1 // loop_header
      %s18 = sphi 0, %s22
      %p19 = scmp.ge.s32.totalorder %s18, 4
      %s28 = sphi 0, %s30
      %s31 = sphi 0, %s28
      %s32 = sphi 0, %s31
      %s48 = sphi 0, %s32
      %s52 = sphi 0, %s52
      %s54 = sphi 0, %s52
      %s55 = sphi 0, %s54
      %s69 = sphi 0, %s55
      %s73 = sphi 0, %s73
      %s75 = sphi 0, %s73
      %s76 = sphi 0, %s75
      %s90 = sphi 0, %s76
      %s94 = sphi 0, %s94
      %s96 = sphi 0, %s94
      %s97 = sphi 0, %s96
      %s111 = sphi 0, %s97
      %s117 = sphi 0, %s119
      %s120 = sphi 0, %s117
      %s121 = sphi 0, %s120
      %s137 = sphi 0, %s121
    $region4: #{tpu_custom_call.1} parent=1 // loop_header_branch
      %21 = sbr.rel (%p19) target = $region8
    $region5: #{tpu_custom_call.1} parent=1 // loop_body
      %s23 = ssub.s32 %s18, 1
      %s24 = ssub.s32 %s18, 2
      %s25 = sadd.s32 %s18, 1
      %s26 = ssub.s32 %s18, %s25
      %p27 = scmp.eq.s32.totalorder %s26, 0
      %s29 = sadd.s32 %s28, 1
      %s30 = scalar_select %p27, %s28, %s29
      %p33 = pneg %p27
      %p34 = scmp.eq.s32.totalorder %s18, 1
      %p35 = por %p33, %p34
      %p36 = scmp.ne.s32.totalorder %s28, %s31
      %p37 = scmp.eq.s32.totalorder %s18, 0
      %p38 = por %p36, %p37
      %p39 = scmp.ne.s32.totalorder %s28, %s31
      %p40 = scmp.eq.s32.totalorder %s23, 1
      %p41 = por %p39, %p40
      %p42 = scmp.ne.s32.totalorder %s31, %s32
      %p43 = scmp.eq.s32.totalorder %s23, 0
      %p44 = por %p42, %p43
      %p45 = scmp.ne.s32.totalorder %s31, %s32
      %p46 = scmp.eq.s32.totalorder %s24, 1
      %p47 = por %p45, %p46
      %p49 = scmp.ne.s32.totalorder %s32, %s48
      %p50 = scmp.eq.s32.totalorder %s24, 0
      %p51 = por %p49, %p50
      %s53 = sadd.s32 %s52, 1
      %p56 = scmp.eq.s32.totalorder %s18, 1
      %p57 = scmp.ne.s32.totalorder %s52, %s54
      %p58 = scmp.eq.s32.totalorder %s18, 0
      %p59 = por %p57, %p58
      %p60 = scmp.ne.s32.totalorder %s52, %s54
      %p61 = scmp.eq.s32.totalorder %s23, 1
      %p62 = por %p60, %p61
      %p63 = scmp.ne.s32.totalorder %s54, %s55
      %p64 = scmp.eq.s32.totalorder %s23, 0
      %p65 = por %p63, %p64
      %p66 = scmp.ne.s32.totalorder %s54, %s55
      %p67 = scmp.eq.s32.totalorder %s24, 1
      %p68 = por %p66, %p67
      %p70 = scmp.ne.s32.totalorder %s55, %s69
      %p71 = scmp.eq.s32.totalorder %s24, 0
      %p72 = por %p70, %p71
      %s74 = sadd.s32 %s73, 1
      %p77 = scmp.eq.s32.totalorder %s18, 1
      %p78 = scmp.ne.s32.totalorder %s73, %s75
      %p79 = scmp.eq.s32.totalorder %s18, 0
      %p80 = por %p78, %p79
      %p81 = scmp.ne.s32.totalorder %s73, %s75
      %p82 = scmp.eq.s32.totalorder %s23, 1
      %p83 = por %p81, %p82
      %p84 = scmp.ne.s32.totalorder %s75, %s76
      %p85 = scmp.eq.s32.totalorder %s23, 0
      %p86 = por %p84, %p85
      %p87 = scmp.ne.s32.totalorder %s75, %s76
      %p88 = scmp.eq.s32.totalorder %s24, 1
      %p89 = por %p87, %p88
      %p91 = scmp.ne.s32.totalorder %s76, %s90
      %p92 = scmp.eq.s32.totalorder %s24, 0
      %p93 = por %p91, %p92
      %s95 = sadd.s32 %s94, 1
      %p98 = scmp.eq.s32.totalorder %s18, 1
      %p99 = scmp.ne.s32.totalorder %s94, %s96
      %p100 = scmp.eq.s32.totalorder %s18, 0
      %p101 = por %p99, %p100
      %p102 = scmp.ne.s32.totalorder %s94, %s96
      %p103 = scmp.eq.s32.totalorder %s23, 1
      %p104 = por %p102, %p103
      %p105 = scmp.ne.s32.totalorder %s96, %s97
      %p106 = scmp.eq.s32.totalorder %s23, 0
      %p107 = por %p105, %p106
      %p108 = scmp.ne.s32.totalorder %s96, %s97
      %p109 = scmp.eq.s32.totalorder %s24, 1
      %p110 = por %p108, %p109
      %p112 = scmp.ne.s32.totalorder %s97, %s111
      %p113 = scmp.eq.s32.totalorder %s24, 0
      %p114 = por %p112, %p113
      %s115 = ssub.s32 %s18, %s25
      %p116 = scmp.eq.s32.totalorder %s115, 0
      %s118 = sadd.s32 %s117, 1
      %s119 = scalar_select %p116, %s117, %s118
      %p122 = pneg %p116
      %p123 = scmp.eq.s32.totalorder %s18, 1
      %p124 = por %p122, %p123
      %p125 = scmp.ne.s32.totalorder %s117, %s120
      %p126 = scmp.eq.s32.totalorder %s18, 0
      %p127 = por %p125, %p126
      %p128 = scmp.ne.s32.totalorder %s117, %s120
      %p129 = scmp.eq.s32.totalorder %s23, 1
      %p130 = por %p128, %p129
      %p131 = scmp.ne.s32.totalorder %s120, %s121
      %p132 = scmp.eq.s32.totalorder %s23, 0
      %p133 = por %p131, %p132
      %p134 = scmp.ne.s32.totalorder %s120, %s121
      %p135 = scmp.eq.s32.totalorder %s24, 1
      %p136 = por %p134, %p135
      %p138 = scmp.ne.s32.totalorder %s121, %s137
      %p139 = scmp.eq.s32.totalorder %s24, 0
      %p140 = por %p138, %p139
      %p141 = scmp.le.s32.totalorder 1, %s18
      %p142 = scmp.lt.s32.totalorder %s18, 3
      %p143 = pnand %p141, %p142
      %p144 = pneg %p143
      // Predicated region
      $region9: #{tpu_custom_call.1} parent=5 // pred_check
        _
      $region10: #{tpu_custom_call.1} parent=5 // pred_check_branch
        %146 = sbr.rel (%p143) target = $region12
      $region11: #{tpu_custom_call.1} parent=5 // pred_region
        %s147 = ssub.s32 %s18, 1
        // Predicated region
        $region13: #{tpu_custom_call.1} parent=11 // pred_check
          %p148 = pneg %p65
        $region14: #{tpu_custom_call.1} parent=11 // pred_check_branch
          %150 = sbr.rel (%p148) target = $region16
        $region15: #{tpu_custom_call.1} parent=11 // pred_region
          %s152 = ssub.s32 64, 64
          %153 = vsyncadd [#allocation6], %s152
          %s155 = sshll.u32 [#allocation5], 4
          %s156 = int_to_ptr.vmem [resolvable:$true] %s155
          %158 = dma.hbm_to_vmem [thread:$0]  %s1, 64, %s156, [#allocation6]
        $region16: #{tpu_custom_call.1} parent=11 // pred_fallthru
          _
        // Predicated region
        $region17: #{tpu_custom_call.1} parent=11 // pred_check
          %p159 = pneg %p86
        $region18: #{tpu_custom_call.1} parent=11 // pred_check_branch
          %161 = sbr.rel (%p159) target = $region20
        $region19: #{tpu_custom_call.1} parent=11 // pred_region
          %s163 = ssub.s32 128, 128
          %164 = vsyncadd [#allocation6], %s163
          %s166 = sshll.u32 [#allocation7], 4
          %s167 = int_to_ptr.vmem [resolvable:$true] %s166
          %169 = dma.hbm_to_vmem [thread:$0]  %s2, 128, %s167, [#allocation6]
        $region20: #{tpu_custom_call.1} parent=11 // pred_fallthru
          _
        // Predicated region
        $region21: #{tpu_custom_call.1} parent=11 // pred_check
          %p170 = pneg %p107
        $region22: #{tpu_custom_call.1} parent=11 // pred_check_branch
          %172 = sbr.rel (%p170) target = $region24
        $region23: #{tpu_custom_call.1} parent=11 // pred_region
          %s174 = ssub.s32 128, 128
          %175 = vsyncadd [#allocation9], %s174
          %s177 = sshll.u32 [#allocation8], 4
          %s178 = int_to_ptr.vmem [resolvable:$true] %s177
          %180 = dma.hbm_to_vmem [thread:$0]  %s3, 128, %s178, [#allocation9]
        $region24: #{tpu_custom_call.1} parent=11 // pred_fallthru
          _
      $region12: #{tpu_custom_call.1} parent=5 // pred_fallthru
        _
      %p181 = scmp.lt.s32.totalorder %s18, 2
      // Predicated region
      $region25: #{tpu_custom_call.1} parent=5 // pred_check
        %p182 = pneg %p181
      $region26: #{tpu_custom_call.1} parent=5 // pred_check_branch
        %184 = sbr.rel (%p182) target = $region28
      $region27: #{tpu_custom_call.1} parent=5 // pred_region
        // Predicated region
        $region29: #{tpu_custom_call.1} parent=27 // pred_check
          %p185 = pneg %p38
        $region30: #{tpu_custom_call.1} parent=27 // pred_check_branch
          %187 = sbr.rel (%p185) target = $region32
        $region31: #{tpu_custom_call.1} parent=27 // pred_region
          %s188 = sand.u32 %s28, 1
          %s189 = scalar_lea.sflag [#allocation3], %s188
          %s190 = sand.u32 %s28, 1
          %s191 = smul.addr %s190, 16
          %s192 = scalar_lea.vmem [#allocation2], %s191
          %s194 = ssub.s32 256, 256
          %195 = vsyncadd %s189, %s194
          %s196 = smul.addr %s18, 4
          %s197 = smul.addr %s196, 64
          %s198 = scalar_lea.hbm %s0, %s197
          %s199 = sshll.u32 %s192, 4
          %s200 = int_to_ptr.vmem [resolvable:$true] %s199
          %205 = dma.hbm_to_vmem [thread:$0]  %s198, 256, %s200, %s189, 64, 64, 4
        $region32: #{tpu_custom_call.1} parent=27 // pred_fallthru
          _
      $region28: #{tpu_custom_call.1} parent=5 // pred_fallthru
        _
      %p206 = scmp.le.s32.totalorder 1, %s18
      %p207 = scmp.lt.s32.totalorder %s18, 3
      %p208 = pnand %p206, %p207
      %p209 = pneg %p208
      // Predicated region
      $region33: #{tpu_custom_call.1} parent=5 // pred_check
        _
      $region34: #{tpu_custom_call.1} parent=5 // pred_check_branch
        %211 = sbr.rel (%p208) target = $region36
      $region35: #{tpu_custom_call.1} parent=5 // pred_region
        %s212 = ssub.s32 %s18, 1
        %s213 = sand.u32 %s31, 1
        %s214 = scalar_lea.sflag [#allocation3], %s213
        %s215 = sand.u32 %s31, 1
        %s216 = smul.addr %s215, 16
        %s217 = scalar_lea.vmem [#allocation2], %s216
        // Predicated region
        $region37: #{tpu_custom_call.1} parent=35 // pred_check
          %p218 = pneg %p44
        $region38: #{tpu_custom_call.1} parent=35 // pred_check_branch
          %220 = sbr.rel (%p218) target = $region40
        $region39: #{tpu_custom_call.1} parent=35 // pred_region
          %221 = dma.done %s214, 256
        $region40: #{tpu_custom_call.1} parent=35 // pred_fallthru
          _
        // Predicated region
        $region41: #{tpu_custom_call.1} parent=35 // pred_check
          %p222 = pneg %p65
        $region42: #{tpu_custom_call.1} parent=35 // pred_check_branch
          %224 = sbr.rel (%p222) target = $region44
        $region43: #{tpu_custom_call.1} parent=35 // pred_region
          %225 = dma.done [#allocation6], 64
        $region44: #{tpu_custom_call.1} parent=35 // pred_fallthru
          _
        // Predicated region
        $region45: #{tpu_custom_call.1} parent=35 // pred_check
          %p226 = pneg %p86
        $region46: #{tpu_custom_call.1} parent=35 // pred_check_branch
          %228 = sbr.rel (%p226) target = $region48
        $region47: #{tpu_custom_call.1} parent=35 // pred_region
          %229 = dma.done [#allocation6], 128
        $region48: #{tpu_custom_call.1} parent=35 // pred_fallthru
          _
        // Predicated region
        $region49: #{tpu_custom_call.1} parent=35 // pred_check
          %p230 = pneg %p107
        $region50: #{tpu_custom_call.1} parent=35 // pred_check_branch
          %232 = sbr.rel (%p230) target = $region52
        $region51: #{tpu_custom_call.1} parent=35 // pred_region
          %233 = dma.done [#allocation9], 128
        $region52: #{tpu_custom_call.1} parent=35 // pred_fallthru
          _
        %s234 = sand.u32 %s31, 1
        %s235 = scalar_lea.sflag [#allocation3], %s234
        %s236 = sand.u32 %s31, 1
        %s237 = smul.addr %s236, 16
        %s238 = scalar_lea.vmem [#allocation2], %s237
        %p239 = pneg %p44
        %p240 = pneg %p41
        %p241 = pneg %p65
        %p242 = pneg %p62
        %p243 = pneg %p86
        %p244 = pneg %p83
        %p245 = pneg %p107
        %p246 = pneg %p104
        %p247 = pneg %p133
        %p248 = pneg %p130
        %s249 = sand.u32 %s120, 1
        %s250 = scalar_lea.sflag [#allocation4], %s249
        %s251 = sand.u32 %s120, 1
        %s252 = smul.addr %s251, 8
        %s253 = scalar_lea.vmem [#allocation10], %s252
        %v255 = vld [vmem:[#allocation5] sm:$0xf]
        %v256 = vld [vmem:[%s217] sm:$0xf]
        %v257 = vld [vmem:[%s217 + $0x4] sm:$0xf]
        %v258 = vld [vmem:[%s217 + $0x8] sm:$0xf]
        %v259 = vld [vmem:[%s217 + $0xc] sm:$0xf]
        %v264 = vunpack.c.l.b16 %v256
        %v265 = vunpack.c.l.b16 %v257
        %v266 = vunpack.c.l.b16 %v258
        %v267 = vunpack.c.l.b16 %v259
        %v268 = vpack.c.b16 %v265, %v264
        %v269 = vpack.c.b16 %v267, %v266
        %vm272 = vcmask 261120
        %v274 = vsel %vm272, %v255, 0
        %276 = vmatprep.subr.bf16.mxu0 0
        %277 = vmatpush1.bf16.msra.mxu0 %v268
        %278 = vmatprep.subr.bf16.mxu0 0
        %279 = vmatpush1.bf16.msra.mxu0 %v269
        %280 = vmatprep.subr.bf16.mxu0 0
        %281 = vmatpush1.bf16.msra.mxu0 0
        %282 = vmatprep.subr.bf16.mxu0 0
        %283 = vmatpush1.bf16.msra.mxu0 0
        %284 = vmatprep.subr.bf16.mxu0 0
        %285 = vmatpush1.bf16.msra.mxu0 0
        %286 = vmatprep.subr.bf16.mxu0 0
        %287 = vmatpush1.bf16.msra.mxu0 0
        %288 = vmatprep.subr.bf16.mxu0 0
        %289 = vmatpush1.bf16.msra.mxu0 0
        %290 = vmatprep.subr.bf16.mxu0 0
        %291 = vmatpush1.bf16.msra.mxu0 0
        %292 = vmatprep.subr.bf16.mxu0 0
        %293 = vmatpush1.bf16.msra.mxu0 0
        %294 = vmatprep.subr.bf16.mxu0 0
        %295 = vmatpush1.bf16.msra.mxu0 0
        %296 = vmatprep.subr.bf16.mxu0 0
        %297 = vmatpush1.bf16.msra.mxu0 0
        %298 = vmatprep.subr.bf16.mxu0 0
        %299 = vmatpush1.bf16.msra.mxu0 0
        %300 = vmatprep.subr.bf16.mxu0 0
        %301 = vmatpush1.bf16.msra.mxu0 0
        %302 = vmatprep.subr.bf16.mxu0 0
        %303 = vmatpush1.bf16.msra.mxu0 0
        %304 = vmatprep.subr.bf16.mxu0 0
        %305 = vmatpush1.bf16.msra.mxu0 0
        %306 = vmatprep.subr.bf16.mxu0 0
        %307 = vmatpush1.bf16.msra.mxu0 0
        %308 = vmatprep.mubr.bf16.mxu0 0
        %309 = vmatmul.mubr.bf16.gmra.mrb[0].mxu0 %v274
        %v310 = vpop.f32.mrb[0].mxu0
        %v311 = vadd.f32 0.0, %v310
        %v312 = vpop.f32.mrb[0].mxu0
        %v313 = vpop.f32.mrb[0].mxu0
        %v314 = vpop.f32.mrb[0].mxu0
        %315 = vdwg.mxu0
        %316 = vadd.xlane.f32.xlu0 %v311
        %v317 = vpop.xlane.xlu0 %316
        %v318 = vrot.slane %v317, 4
        %v319 = vadd.f32 %v317, %v318
        %v320 = vrot.slane %v319, 2
        %v321 = vadd.f32 %v319, %v320
        %v322 = vrot.slane %v321, 1
        %v323 = vadd.f32 %v321, %v322
        %s324 = vtos %v323
        %v325 = vmul.f32 %v311, %v311
        %326 = vadd.xlane.f32.xlu0 %v325
        %v327 = vpop.xlane.xlu0 %326
        %v328 = vrot.slane %v327, 4
        %v329 = vadd.f32 %v327, %v328
        %v330 = vrot.slane %v329, 2
        %v331 = vadd.f32 %v329, %v330
        %v332 = vrot.slane %v331, 1
        %v333 = vadd.f32 %v331, %v332
        %s334 = vtos %v333
        %s335 = smul.f32 %s324, 0.0078125
        %s336 = smul.f32 %s334, 0.0078125
        %s337 = smul.f32 %s335, %s335
        %s338 = ssub.f32 %s336, %s337
        %s339 = sadd.f32 %s338, 1e-08
        %v340 = vstv %s339
        %v341 = vrsqrt.pop %v340
        %s342 = vtos %v341
        %v343 = vld [vmem:[#allocation7] sm:$0xff]
        %v344 = vstv %s342
        %v345 = vmul.f32 %v343, %v344
        %v346 = vld [vmem:[#allocation8] sm:$0xff]
        %v347 = vstv %s335
        %v348 = vmul.f32 %v347, %v345
        %v349 = vsub.f32 %v346, %v348
        %351 = vset.pattern.permute.xlu0 0
        %352 = vperm.xlu0 %351, %v345
        %v353 = vpop.permute.xlu0 %352
        %v355 = vmul.f32 %v311, %v353
        %357 = vset.pattern.permute.xlu0 0
        %358 = vperm.xlu0 %357, %v349
        %v359 = vpop.permute.xlu0 %358
        %v361 = vadd.f32 %v355, %v359
        %362 = vst [vmem:[%s253] sm:$0xff] %v361
        %s363 = sand.u32 %s120, 1
        %s364 = scalar_lea.sflag [#allocation4], %s363
        %s365 = sand.u32 %s120, 1
        %s366 = smul.addr %s365, 8
        %s367 = scalar_lea.vmem [#allocation10], %s366
        // Predicated region
        $region53: #{tpu_custom_call.1} parent=35 // pred_check
          %p368 = pneg %p130
        $region54: #{tpu_custom_call.1} parent=35 // pred_check_branch
          %370 = sbr.rel (%p368) target = $region56
        $region55: #{tpu_custom_call.1} parent=35 // pred_region
          %s372 = ssub.s32 128, 128
          %373 = vsyncadd %s364, %s372
          %s374 = smul.addr %s23, 128
          %s375 = scalar_lea.hbm %s4, %s374
          %s377 = sshll.u32 %s367, 4
          %s378 = int_to_ptr.vmem [resolvable:$true] %s377
          %380 = dma.vmem_to_hbm [thread:$0]  %s378, 128, %s375, %s364
        $region56: #{tpu_custom_call.1} parent=35 // pred_fallthru
          _
      $region36: #{tpu_custom_call.1} parent=5 // pred_fallthru
        _
      %p381 = scmp.le.s32.totalorder 2, %s18
      // Predicated region
      $region57: #{tpu_custom_call.1} parent=5 // pred_check
        %p382 = pneg %p381
      $region58: #{tpu_custom_call.1} parent=5 // pred_check_branch
        %384 = sbr.rel (%p382) target = $region60
      $region59: #{tpu_custom_call.1} parent=5 // pred_region
        %s385 = ssub.s32 %s18, 2
        // Predicated region
        $region61: #{tpu_custom_call.1} parent=59 // pred_check
          %p386 = pneg %p136
        $region62: #{tpu_custom_call.1} parent=59 // pred_check_branch
          %388 = sbr.rel (%p386) target = $region64
        $region63: #{tpu_custom_call.1} parent=59 // pred_region
          %s389 = sand.u32 %s121, 1
          %s390 = scalar_lea.sflag [#allocation4], %s389
          %s391 = sand.u32 %s121, 1
          %s392 = smul.addr %s391, 8
          %s393 = scalar_lea.vmem [#allocation10], %s392
          %394 = dma.done %s390, 128
        $region64: #{tpu_custom_call.1} parent=59 // pred_fallthru
          _
      $region60: #{tpu_custom_call.1} parent=5 // pred_fallthru
        _
    $region6: #{tpu_custom_call.1} parent=1 // loop_footer
      %s22 = sadd.s32 1, %s18
    $region7: #{tpu_custom_call.1} parent=1 // loop_footer_branch
      %17 = sbr.rel target = $region3
    $region8: #{tpu_custom_call.1} parent=1 // loop_exit
      _
    %395 = vsyncpa [#allocation3], 1
    %s396 = scalar_lea.sflag [#allocation3], 1
    %397 = vsyncpa %s396, 1
    %398 = vsyncpa [#allocation6], 1
    %399 = vsyncpa [#allocation9], 1
    %400 = vsyncpa [#allocation4], 1
    %s401 = scalar_lea.sflag [#allocation4], 1
    %402 = vsyncpa %s401, 1

</llo_original>
